<compile_context>
chip_gen: v7x
topology: tpu7x:2x2x1
jax: 0.10.0
libtpu: 0.0.40
codegen_flags: <defaults>
</compile_context>

<pallas_src>
import jax
import jax.numpy as jnp
from jax.experimental import pallas as pl
from jax.experimental.pallas import tpu as pltpu


def critic_kernel(xT_ref, w1t_ref, b1_ref, w2t_ref, b2_ref, w3r_ref, b3_ref, out_ref):
    # layer 1: [128, S_pad] @ [S_pad, TB] -> [128, TB]  (f32 MXU dot; tiny padded K is
    # free on the idle MXU and unloads the previously-binding VPU/XLU slots).
    h1 = jnp.maximum(
        jnp.dot(w1t_ref[...], xT_ref[...], preferred_element_type=jnp.float32)
        + b1_ref[...],
        0.0)

    # layer 2: [256, 128] @ [128, TB] -> [256, TB]  (bf16-in / f32-accumulate MXU dot;
    # bias + ReLU fused in one pass, no extra materialized temporaries).
    h2 = jnp.maximum(
        jnp.dot(w2t_ref[...], h1.astype(jnp.bfloat16),
                preferred_element_type=jnp.float32)
        + b2_ref[...],
        0.0)

    # layer 3: [1, 256] @ [256, TB] -> [1, TB]  (M=1 wastes MXU rows, but MXU cycles
    # are free here; avoids the old VPU multiply + XLU lane-reduce).
    v = jnp.dot(w3r_ref[...], h2, preferred_element_type=jnp.float32) + b3_ref[...]

    # Lane-dense [1, TB] output block -> unmasked vector stores.
    out_ref[...] = v.astype(out_ref.dtype)


def _megacore_factor():
    """TensorCores a single pallas_call grid can shard across on this chip."""
    try:
        kind = jax.devices()[0].device_kind.lower()
    except Exception:
        return 1
    # v4 / v5p / v7x expose two TensorCores per device (megacore); v5e/v6e expose one.
    if any(tag in kind for tag in ("v7", "7x", "v4", "v5p")):
        return 2
    return 1


def _pick_batch_tile(batch, n_cores, cap):
    """Batch tile on the lane axis: either the full batch or a multiple of 128.

    Per-lane-column VMEM cost is ~3 KiB (double-buffered x/out blocks + f32/bf16
    activations), so cap=4096 keeps the worst case around 13 MiB — comfortably inside
    the 32 MiB limit we request (and v7x's 64 MiB physical VMEM).
    """
    if n_cores == 1 and batch <= cap:
        return batch, 1                      # grid=(1,): single step, no per-step tax
    target = pl.cdiv(batch, n_cores)         # aim for one tile per TensorCore
    tb = min(cap, target)
    tb = ((tb + 127) // 128) * 128           # lane-axis blocks must be multiples of 128
    if tb >= batch:
        return batch, 1
    return tb, pl.cdiv(batch, tb)


def critic_forward(x, params, *, batch_tile_cap=4096):
    """x: [B, state_size] float32 -> value: [B, 1] float32."""
    w1, b1, w2, b2, w3, b3 = params           # w: [in, out], b: [1, out]
    B, S = x.shape
    H1 = w1.shape[1]
    H2 = w2.shape[1]
    S_pad = max(8, ((S + 7) // 8) * 8)        # pad K of layer 1 to a full sublane tile

    # Transposed layout ("batch on the lane axis"): lane-dense x DMA and output stores,
    # no 32x lane padding of the x block in VMEM.  These are tiny one-off XLA ops.
    xT = jnp.zeros((S_pad, B), x.dtype).at[:S, :].set(x.T)
    w1t = jnp.zeros((H1, S_pad), w1.dtype).at[:, :S].set(w1.T)     # [128, S_pad] f32
    b1c = b1.reshape(H1, 1)                                        # [128, 1]
    w2t = w2.T.astype(jnp.bfloat16)                                # [256, 128] bf16
    b2c = b2.reshape(H2, 1)                                        # [256, 1]
    w3r = w3.T                                                     # [1, 256] f32
    b3c = b3.reshape(1, 1)                                         # [1, 1]

    tb, n_steps = _pick_batch_tile(B, _megacore_factor(), batch_tile_cap)

    def const_spec(a):                        # same block every step -> stays resident
        return pl.BlockSpec(a.shape, lambda i: (0, 0))

    out_row = pl.pallas_call(
        critic_kernel,
        out_shape=jax.ShapeDtypeStruct((1, B), jnp.float32),
        grid=(n_steps,),
        in_specs=[
            pl.BlockSpec((S_pad, tb), lambda i: (0, i)),   # x^T: tiled over batch lanes
            const_spec(w1t), const_spec(b1c),
            const_spec(w2t), const_spec(b2c),
            const_spec(w3r), const_spec(b3c),
        ],
        out_specs=pl.BlockSpec((1, tb), lambda i: (0, i)),
        compiler_params=pltpu.CompilerParams(
            # Batch tiles are independent -> shard grid steps across TCs on megacore.
            dimension_semantics=("parallel",),
            # Raises v5e's 16 MiB scoped default; <= defaults on v6e/v7x; << v7x's
            # 64 MiB physical.  Worst-case working set at cap=4096 is ~13 MiB.
            vmem_limit_bytes=32 * 1024 * 1024,
        ),
    )(xT, w1t, b1c, w2t, b2c, w3r, b3c)

    return out_row.reshape(B, 1)


def init_params(key, state_size):
    """Deterministic synthetic init (uniform, PyTorch-Linear-style bounds)."""
    ks = jax.random.split(key, 6)

    def linear(kw, kb, fan_in, fan_out):
        bound = 1.0 / jnp.sqrt(jnp.float32(fan_in))
        w = jax.random.uniform(kw, (fan_in, fan_out), jnp.float32, -bound, bound)
        b = jax.random.uniform(kb, (1, fan_out), jnp.float32, -bound, bound)
        return w, b

    w1, b1 = linear(ks[0], ks[1], state_size, 128)
    w2, b2 = linear(ks[2], ks[3], 128, 256)
    w3, b3 = linear(ks[4], ks[5], 256, 1)
    return (w1, b1, w2, b2, w3, b3)


def critic_ref(x, params):
    """Pure-JAX f32 reference matching the PyTorch module's forward."""
    w1, b1, w2, b2, w3, b3 = params
    hi = jax.lax.Precision.HIGHEST
    h1 = jnp.maximum(jnp.dot(x, w1, precision=hi) + b1, 0.0)
    h2 = jnp.maximum(jnp.dot(h1, w2, precision=hi) + b2, 0.0)
    return jnp.dot(h2, w3, precision=hi) + b3


if __name__ == "__main__":
    key = jax.random.PRNGKey(0)
    k_p, k_x1, k_x2, k_x3 = jax.random.split(key, 4)

    state_size = 4   # e.g. CartPole observation dim
    params = init_params(k_p, state_size)

    # Layer-2 runs bf16-in/f32-accumulate on the MXU and layers 1/3 run at the MXU's
    # default f32 matmul precision, so allow a few e-3 of absolute noise vs the
    # HIGHEST-precision f32 reference.
    TOL = dict(atol=2e-2, rtol=2e-2)

    # Small batch: single tile (tb == B), grid=(1,).
    x_small = jax.random.normal(k_x1, (8, state_size), jnp.float32)
    out_small = jax.block_until_ready(critic_forward(x_small, params))
    assert out_small.shape == (8, 1)
    assert jnp.allclose(out_small, critic_ref(x_small, params), **TOL)

    # Larger batch: one tile per TensorCore (grid=(1,) on v5e/v6e, (2,) on megacore).
    x_big = jax.random.normal(k_x2, (1024, state_size), jnp.float32)
    out_big = jax.block_until_ready(critic_forward(x_big, params))
    assert out_big.shape == (1024, 1)
    assert jnp.allclose(out_big, critic_ref(x_big, params), **TOL)

    # Ragged batch with a small tile cap: exercises the partial last tile (output
    # writeback is clipped by Pallas; padded columns never feed a reduction).
    x_rag = jax.random.normal(k_x3, (1000, state_size), jnp.float32)
    out_rag = jax.block_until_ready(critic_forward(x_rag, params, batch_tile_cap=512))
    assert out_rag.shape == (1000, 1)
    assert jnp.allclose(out_rag, critic_ref(x_rag, params), **TOL)

    print("KERNEL_OK")
</pallas_src>

<mosaic_0001>
module attributes {stable_mosaic.version = 11 : i64} {
  func.func @critic_kernel(%arg0: i32, %arg1: memref<8x8xf32, #tpu.memory_space<vmem>>, %arg2: memref<128x8xf32, #tpu.memory_space<vmem>>, %arg3: memref<128x1xf32, #tpu.memory_space<vmem>>, %arg4: memref<256x128xbf16, #tpu.memory_space<vmem>>, %arg5: memref<256x1xf32, #tpu.memory_space<vmem>>, %arg6: memref<1x256xf32, #tpu.memory_space<vmem>>, %arg7: memref<1x1xf32, #tpu.memory_space<vmem>>, %arg8: memref<1x8xf32, #tpu.memory_space<vmem>>) attributes {dimension_semantics = [#tpu.dimension_semantics<parallel>], iteration_bounds = array<i64: 1>, scalar_prefetch = 0 : i64, scratch_operands = 0 : i64, tpu.core_type = #tpu.core_type<tc>, window_params = [{transform_indices = @transform_0, window_bounds = array<i64: 8, 8>}, {pipeline_mode = #tpu.pipeline_mode<synchronous>, transform_indices = @transform_1, window_bounds = array<i64: 128, 8>}, {pipeline_mode = #tpu.pipeline_mode<synchronous>, transform_indices = @transform_2, window_bounds = array<i64: 128, 1>}, {pipeline_mode = #tpu.pipeline_mode<synchronous>, transform_indices = @transform_3, window_bounds = array<i64: 256, 128>}, {pipeline_mode = #tpu.pipeline_mode<synchronous>, transform_indices = @transform_4, window_bounds = array<i64: 256, 1>}, {pipeline_mode = #tpu.pipeline_mode<synchronous>, transform_indices = @transform_5, window_bounds = array<i64: 1, 256>}, {pipeline_mode = #tpu.pipeline_mode<synchronous>, transform_indices = @transform_6, window_bounds = array<i64: 1, 1>}, {transform_indices = @transform_7, window_bounds = array<i64: 1, 8>}]} {
    %c0 = arith.constant 0 : index
    %c0_0 = arith.constant 0 : index
    %0 = vector.load %arg2[%c0, %c0_0] : memref<128x8xf32, #tpu.memory_space<vmem>>, vector<128x8xf32>
    %c0_1 = arith.constant 0 : index
    %c0_2 = arith.constant 0 : index
    %1 = vector.load %arg1[%c0_1, %c0_2] : memref<8x8xf32, #tpu.memory_space<vmem>>, vector<8x8xf32>
    %cst = arith.constant dense<0.000000e+00> : vector<128x8xf32>
    %2 = tpu.matmul %0, %1, %cst {dimension_numbers = #tpu.dot_dimension_numbers<[1], [0], [0], [1], [0, 0, 1, 1], [], []>} : vector<128x8xf32>, vector<8x8xf32>, vector<128x8xf32> -> vector<128x8xf32>
    %c0_3 = arith.constant 0 : index
    %c0_4 = arith.constant 0 : index
    %3 = vector.load %arg3[%c0_3, %c0_4] : memref<128x1xf32, #tpu.memory_space<vmem>>, vector<128x1xf32>
    %4 = vector.broadcast %3 : vector<128x1xf32> to vector<128x8xf32>
    %5 = arith.addf %2, %4 : vector<128x8xf32>
    %cst_5 = arith.constant 0.000000e+00 : f32
    %6 = vector.broadcast %cst_5 : f32 to vector<128x8xf32>
    %7 = arith.maximumf %5, %6 : vector<128x8xf32>
    %c0_6 = arith.constant 0 : index
    %c0_7 = arith.constant 0 : index
    %8 = vector.load %arg4[%c0_6, %c0_7] : memref<256x128xbf16, #tpu.memory_space<vmem>>, vector<256x128xbf16>
    %9 = arith.truncf %7 : vector<128x8xf32> to vector<128x8xbf16>
    %cst_8 = arith.constant dense<0.000000e+00> : vector<256x8xf32>
    %10 = tpu.matmul %8, %9, %cst_8 {dimension_numbers = #tpu.dot_dimension_numbers<[1], [0], [0], [1], [0, 0, 1, 1], [], []>} : vector<256x128xbf16>, vector<128x8xbf16>, vector<256x8xf32> -> vector<256x8xf32>
    %c0_9 = arith.constant 0 : index
    %c0_10 = arith.constant 0 : index
    %11 = vector.load %arg5[%c0_9, %c0_10] : memref<256x1xf32, #tpu.memory_space<vmem>>, vector<256x1xf32>
    %12 = vector.broadcast %11 : vector<256x1xf32> to vector<256x8xf32>
    %13 = arith.addf %10, %12 : vector<256x8xf32>
    %cst_11 = arith.constant 0.000000e+00 : f32
    %14 = vector.broadcast %cst_11 : f32 to vector<256x8xf32>
    %15 = arith.maximumf %13, %14 : vector<256x8xf32>
    %c0_12 = arith.constant 0 : index
    %c0_13 = arith.constant 0 : index
    %16 = vector.load %arg6[%c0_12, %c0_13] : memref<1x256xf32, #tpu.memory_space<vmem>>, vector<1x256xf32>
    %cst_14 = arith.constant dense<0.000000e+00> : vector<1x8xf32>
    %17 = tpu.matmul %16, %15, %cst_14 {dimension_numbers = #tpu.dot_dimension_numbers<[1], [0], [0], [1], [0, 0, 1, 1], [], []>} : vector<1x256xf32>, vector<256x8xf32>, vector<1x8xf32> -> vector<1x8xf32>
    %c0_15 = arith.constant 0 : index
    %c0_16 = arith.constant 0 : index
    %18 = vector.load %arg7[%c0_15, %c0_16] : memref<1x1xf32, #tpu.memory_space<vmem>>, vector<1x1xf32>
    %19 = vector.broadcast %18 : vector<1x1xf32> to vector<1x8xf32>
    %20 = arith.addf %17, %19 : vector<1x8xf32>
    %c0_17 = arith.constant 0 : index
    %c0_18 = arith.constant 0 : index
    %21 = vector.load %arg8[%c0_17, %c0_18] : memref<1x8xf32, #tpu.memory_space<vmem>>, vector<1x8xf32>
    tpu.vector_store %arg8[%c0_17, %c0_18], %20 {strides = array<i32>} : memref<1x8xf32, #tpu.memory_space<vmem>>, vector<1x8xf32>,
    return
  }
  func.func @transform_0(%arg0: i32) -> (i32, i32) {
    %c0_i32 = arith.constant 0 : i32
    %c0_i32_0 = arith.constant 0 : i32
    return %c0_i32, %arg0 : i32, i32
  }
  func.func @transform_1(%arg0: i32) -> (i32, i32) {
    %c0_i32 = arith.constant 0 : i32
    %c0_i32_0 = arith.constant 0 : i32
    %c0_i32_1 = arith.constant 0 : i32
    return %c0_i32, %c0_i32_0 : i32, i32
  }
  func.func @transform_2(%arg0: i32) -> (i32, i32) {
    %c0_i32 = arith.constant 0 : i32
    %c0_i32_0 = arith.constant 0 : i32
    %c0_i32_1 = arith.constant 0 : i32
    return %c0_i32, %c0_i32_0 : i32, i32
  }
  func.func @transform_3(%arg0: i32) -> (i32, i32) {
    %c0_i32 = arith.constant 0 : i32
    %c0_i32_0 = arith.constant 0 : i32
    %c0_i32_1 = arith.constant 0 : i32
    return %c0_i32, %c0_i32_0 : i32, i32
  }
  func.func @transform_4(%arg0: i32) -> (i32, i32) {
    %c0_i32 = arith.constant 0 : i32
    %c0_i32_0 = arith.constant 0 : i32
    %c0_i32_1 = arith.constant 0 : i32
    return %c0_i32, %c0_i32_0 : i32, i32
  }
  func.func @transform_5(%arg0: i32) -> (i32, i32) {
    %c0_i32 = arith.constant 0 : i32
    %c0_i32_0 = arith.constant 0 : i32
    %c0_i32_1 = arith.constant 0 : i32
    return %c0_i32, %c0_i32_0 : i32, i32
  }
  func.func @transform_6(%arg0: i32) -> (i32, i32) {
    %c0_i32 = arith.constant 0 : i32
    %c0_i32_0 = arith.constant 0 : i32
    %c0_i32_1 = arith.constant 0 : i32
    return %c0_i32, %c0_i32_0 : i32, i32
  }
  func.func @transform_7(%arg0: i32) -> (i32, i32) {
    %c0_i32 = arith.constant 0 : i32
    %c0_i32_0 = arith.constant 0 : i32
    return %c0_i32, %arg0 : i32, i32
  }
}

</mosaic_0001>

<llo_original>
// kernel: tpu_custom_call.1
$region0: #{tpu_custom_call.1}
  #allocation0 [shape = 'u32[]', space=smem, size = 0x4, offset = 0x4, fixed_abs, tag = 'smem constant byte address 0x4 - core index']
  #allocation1 [shape = 'u32[144,128]{1,0:T(1,128)}', space=vmem, size = 0x12000, scoped, tag = 'internal scratch']
  #allocation2 [shape = 'f32[1,1]{1,0:T(1,128)S(1)}', space=vmem, size = 0x200, scoped, tag = 'scoped memory for tpu_custom_call.1']
  %s0 = inlined_call_operand.vmem [shape: f32[8,8], index: 0, kind: input, shape index: {}]
  %s1 = inlined_call_operand.vmem [shape: f32[128,8], index: 1, kind: input, shape index: {}]
  %s2 = inlined_call_operand.vmem [shape: f32[128,1], index: 2, kind: input, shape index: {}]
  %s3 = inlined_call_operand.vmem [shape: bf16[256,128], index: 3, kind: input, shape index: {}]
  %s4 = inlined_call_operand.vmem [shape: f32[256,1], index: 4, kind: input, shape index: {}]
  %s5 = inlined_call_operand.vmem [shape: f32[1,256], index: 5, kind: input, shape index: {}]
  %s6 = inlined_call_operand.<no memory space> [shape: f32[1,1], index: 6, kind: input, shape index: {}]
  %s7 = inlined_call_operand.hbm [shape: f32[1,8], index: 7, kind: output, shape index: {}]
  %s8 = sld [smem:[#allocation0]]
  $region38: #{tpu_custom_call.1} parent=0
    _
  %s10 = ssub.s32 1, %s8
  %s11 = scalar_select 0, %s10, %s8
  %v12 = vstv %s6
  %13 = vst [vmem:[#allocation2] sm:$0x1] %v12
  $region1: #{tpu_custom_call.1} parent=0
    #allocation3 [shape = 'u8[512]{0}', space=vmem, size = 0x400, scoped, tag = 'output window, operand 0, single buffered']
    #allocation4 [shape = 's32[1]{0}', space=sflag, size = 0x4, scoped, tag = 'scoped memory for tpu_custom_call.1']
    %14 = vsyncpa [#allocation4], 0
    // Predicated region
    $region2: #{tpu_custom_call.1} parent=1 // pred_check
      _
    $region3: #{tpu_custom_call.1} parent=1 // pred_check_branch
      %16 = sbr.rel (0) target = $region5
    $region4: #{tpu_custom_call.1} parent=1 // pred_region
      _
    $region5: #{tpu_custom_call.1} parent=1 // pred_fallthru
      _
    // Predicated region
    $region6: #{tpu_custom_call.1} parent=1 // pred_check
      _
    $region7: #{tpu_custom_call.1} parent=1 // pred_check_branch
      %18 = sbr.rel (0) target = $region9
    $region8: #{tpu_custom_call.1} parent=1 // pred_region
      _
    $region9: #{tpu_custom_call.1} parent=1 // pred_fallthru
      _
    // Predicated region
    $region10: #{tpu_custom_call.1} parent=1 // pred_check
      _
    $region11: #{tpu_custom_call.1} parent=1 // pred_check_branch
      %20 = sbr.rel (0) target = $region13
    $region12: #{tpu_custom_call.1} parent=1 // pred_region
      _
    $region13: #{tpu_custom_call.1} parent=1 // pred_fallthru
      _
    // Predicated region
    $region14: #{tpu_custom_call.1} parent=1 // pred_check
      _
    $region15: #{tpu_custom_call.1} parent=1 // pred_check_branch
      %22 = sbr.rel (0) target = $region17
    $region16: #{tpu_custom_call.1} parent=1 // pred_region
      _
    $region17: #{tpu_custom_call.1} parent=1 // pred_fallthru
      _
    // Predicated region
    $region18: #{tpu_custom_call.1} parent=1 // pred_check
      _
    $region19: #{tpu_custom_call.1} parent=1 // pred_check_branch
      %24 = sbr.rel (0) target = $region21
    $region20: #{tpu_custom_call.1} parent=1 // pred_region
      _
    $region21: #{tpu_custom_call.1} parent=1 // pred_fallthru
      _
    // Predicated region
    $region22: #{tpu_custom_call.1} parent=1 // pred_check
      _
    $region23: #{tpu_custom_call.1} parent=1 // pred_check_branch
      %26 = sbr.rel (0) target = $region25
    $region24: #{tpu_custom_call.1} parent=1 // pred_region
      _
    $region25: #{tpu_custom_call.1} parent=1 // pred_fallthru
      _
    // Predicated region
    $region26: #{tpu_custom_call.1} parent=1 // pred_check
      _
    $region27: #{tpu_custom_call.1} parent=1 // pred_check_branch
      %28 = sbr.rel (0) target = $region29
    $region28: #{tpu_custom_call.1} parent=1 // pred_region
      _
    $region29: #{tpu_custom_call.1} parent=1 // pred_fallthru
      _
    %v30 = vld [vmem:[%s1] sm:$0xff]
    %v31 = vld [vmem:[%s1 + $0x8] sm:$0xff]
    %v32 = vld [vmem:[%s1 + $0x10] sm:$0xff]
    %v33 = vld [vmem:[%s1 + $0x18] sm:$0xff]
    %v34 = vld [vmem:[%s1 + $0x20] sm:$0xff]
    %v35 = vld [vmem:[%s1 + $0x28] sm:$0xff]
    %v36 = vld [vmem:[%s1 + $0x30] sm:$0xff]
    %v37 = vld [vmem:[%s1 + $0x38] sm:$0xff]
    %v38 = vld [vmem:[%s1 + $0x40] sm:$0xff]
    %v39 = vld [vmem:[%s1 + $0x48] sm:$0xff]
    %v40 = vld [vmem:[%s1 + $0x50] sm:$0xff]
    %v41 = vld [vmem:[%s1 + $0x58] sm:$0xff]
    %v42 = vld [vmem:[%s1 + $0x60] sm:$0xff]
    %v43 = vld [vmem:[%s1 + $0x68] sm:$0xff]
    %v44 = vld [vmem:[%s1 + $0x70] sm:$0xff]
    %v45 = vld [vmem:[%s1 + $0x78] sm:$0xff]
    %v46 = vld [vmem:[%s0] sm:$0xff]
    %v47 = vld [vmem:[%s2] sm:$0xff]
    %v48 = vld [vmem:[%s2 + $0x8] sm:$0xff]
    %v49 = vld [vmem:[%s2 + $0x10] sm:$0xff]
    %v50 = vld [vmem:[%s2 + $0x18] sm:$0xff]
    %v51 = vld [vmem:[%s2 + $0x20] sm:$0xff]
    %v52 = vld [vmem:[%s2 + $0x28] sm:$0xff]
    %v53 = vld [vmem:[%s2 + $0x30] sm:$0xff]
    %v54 = vld [vmem:[%s2 + $0x38] sm:$0xff]
    %v55 = vld [vmem:[%s2 + $0x40] sm:$0xff]
    %v56 = vld [vmem:[%s2 + $0x48] sm:$0xff]
    %v57 = vld [vmem:[%s2 + $0x50] sm:$0xff]
    %v58 = vld [vmem:[%s2 + $0x58] sm:$0xff]
    %v59 = vld [vmem:[%s2 + $0x60] sm:$0xff]
    %v60 = vld [vmem:[%s2 + $0x68] sm:$0xff]
    %v61 = vld [vmem:[%s2 + $0x70] sm:$0xff]
    %v62 = vld [vmem:[%s2 + $0x78] sm:$0xff]
    %64 = vset.pattern.permute.xlu0 0
    %65 = vperm.xlu0 %64, %v47
    %v66 = vpop.permute.xlu0 %65
    %69 = vset.pattern.permute.xlu0 0
    %70 = vperm.xlu0 %69, %v48
    %v71 = vpop.permute.xlu0 %70
    %74 = vset.pattern.permute.xlu0 0
    %75 = vperm.xlu0 %74, %v49
    %v76 = vpop.permute.xlu0 %75
    %79 = vset.pattern.permute.xlu0 0
    %80 = vperm.xlu0 %79, %v50
    %v81 = vpop.permute.xlu0 %80
    %84 = vset.pattern.permute.xlu0 0
    %85 = vperm.xlu0 %84, %v51
    %v86 = vpop.permute.xlu0 %85
    %89 = vset.pattern.permute.xlu0 0
    %90 = vperm.xlu0 %89, %v52
    %v91 = vpop.permute.xlu0 %90
    %94 = vset.pattern.permute.xlu0 0
    %95 = vperm.xlu0 %94, %v53
    %v96 = vpop.permute.xlu0 %95
    %99 = vset.pattern.permute.xlu0 0
    %100 = vperm.xlu0 %99, %v54
    %v101 = vpop.permute.xlu0 %100
    %104 = vset.pattern.permute.xlu0 0
    %105 = vperm.xlu0 %104, %v55
    %v106 = vpop.permute.xlu0 %105
    %109 = vset.pattern.permute.xlu0 0
    %110 = vperm.xlu0 %109, %v56
    %v111 = vpop.permute.xlu0 %110
    %114 = vset.pattern.permute.xlu0 0
    %115 = vperm.xlu0 %114, %v57
    %v116 = vpop.permute.xlu0 %115
    %119 = vset.pattern.permute.xlu0 0
    %120 = vperm.xlu0 %119, %v58
    %v121 = vpop.permute.xlu0 %120
    %124 = vset.pattern.permute.xlu0 0
    %125 = vperm.xlu0 %124, %v59
    %v126 = vpop.permute.xlu0 %125
    %129 = vset.pattern.permute.xlu0 0
    %130 = vperm.xlu0 %129, %v60
    %v131 = vpop.permute.xlu0 %130
    %134 = vset.pattern.permute.xlu0 0
    %135 = vperm.xlu0 %134, %v61
    %v136 = vpop.permute.xlu0 %135
    %139 = vset.pattern.permute.xlu0 0
    %140 = vperm.xlu0 %139, %v62
    %v141 = vpop.permute.xlu0 %140
    %vm143 = vcmask 64512
    %v145 = vsel %vm143, %v30, 0
    %v148 = vsel %vm143, %v31, 0
    %v151 = vsel %vm143, %v32, 0
    %v154 = vsel %vm143, %v33, 0
    %v157 = vsel %vm143, %v34, 0
    %v160 = vsel %vm143, %v35, 0
    %v163 = vsel %vm143, %v36, 0
    %v166 = vsel %vm143, %v37, 0
    %v169 = vsel %vm143, %v38, 0
    %v172 = vsel %vm143, %v39, 0
    %v175 = vsel %vm143, %v40, 0
    %v178 = vsel %vm143, %v41, 0
    %v181 = vsel %vm143, %v42, 0
    %v184 = vsel %vm143, %v43, 0
    %v187 = vsel %vm143, %v44, 0
    %v190 = vsel %vm143, %v45, 0
    %192 = vmatprep.subr.mxu0 0.0
    %193 = vmatpush1.msra.mxu0 %v46
    %194 = vmatprep.subr.mxu0 0.0
    %195 = vmatpush1.msra.mxu0 0.0
    %196 = vmatprep.subr.mxu0 0.0
    %197 = vmatpush1.msra.mxu0 0.0
    %198 = vmatprep.subr.mxu0 0.0
    %199 = vmatpush1.msra.mxu0 0.0
    %200 = vmatprep.subr.mxu0 0.0
    %201 = vmatpush1.msra.mxu0 0.0
    %202 = vmatprep.subr.mxu0 0.0
    %203 = vmatpush1.msra.mxu0 0.0
    %204 = vmatprep.subr.mxu0 0.0
    %205 = vmatpush1.msra.mxu0 0.0
    %206 = vmatprep.subr.mxu0 0.0
    %207 = vmatpush1.msra.mxu0 0.0
    %208 = vmatprep.subr.mxu0 0.0
    %209 = vmatpush1.msra.mxu0 0.0
    %210 = vmatprep.subr.mxu0 0.0
    %211 = vmatpush1.msra.mxu0 0.0
    %212 = vmatprep.subr.mxu0 0.0
    %213 = vmatpush1.msra.mxu0 0.0
    %214 = vmatprep.subr.mxu0 0.0
    %215 = vmatpush1.msra.mxu0 0.0
    %216 = vmatprep.subr.mxu0 0.0
    %217 = vmatpush1.msra.mxu0 0.0
    %218 = vmatprep.subr.mxu0 0.0
    %219 = vmatpush1.msra.mxu0 0.0
    %220 = vmatprep.subr.mxu0 0.0
    %221 = vmatpush1.msra.mxu0 0.0
    %222 = vmatprep.subr.mxu0 0.0
    %223 = vmatpush1.msra.mxu0 0.0
    %224 = vmatprep.subr.mxu0 0.0
    %225 = vmatpush1.msra.mxu0 0.0
    %226 = vmatprep.subr.mxu0 0.0
    %227 = vmatpush1.msra.mxu0 0.0
    %228 = vmatprep.subr.mxu0 0.0
    %229 = vmatpush1.msra.mxu0 0.0
    %230 = vmatprep.subr.mxu0 0.0
    %231 = vmatpush1.msra.mxu0 0.0
    %232 = vmatprep.subr.mxu0 0.0
    %233 = vmatpush1.msra.mxu0 0.0
    %234 = vmatprep.subr.mxu0 0.0
    %235 = vmatpush1.msra.mxu0 0.0
    %236 = vmatprep.subr.mxu0 0.0
    %237 = vmatpush1.msra.mxu0 0.0
    %238 = vmatprep.subr.mxu0 0.0
    %239 = vmatpush1.msra.mxu0 0.0
    %240 = vmatprep.subr.mxu0 0.0
    %241 = vmatpush1.msra.mxu0 0.0
    %242 = vmatprep.subr.mxu0 0.0
    %243 = vmatpush1.msra.mxu0 0.0
    %244 = vmatprep.subr.mxu0 0.0
    %245 = vmatpush1.msra.mxu0 0.0
    %246 = vmatprep.subr.mxu0 0.0
    %247 = vmatpush1.msra.mxu0 0.0
    %248 = vmatprep.subr.mxu0 0.0
    %249 = vmatpush1.msra.mxu0 0.0
    %250 = vmatprep.subr.mxu0 0.0
    %251 = vmatpush1.msra.mxu0 0.0
    %252 = vmatprep.subr.mxu0 0.0
    %253 = vmatpush1.msra.mxu0 0.0
    %254 = vmatprep.subr.mxu0 0.0
    %255 = vmatpush1.msra.mxu0 0.0
    %256 = vmatprep.mubr.f32.mxu0 0.0
    %257 = vmatmul.mubr.f32.gmra.mrb[0].mxu0 %v145
    %v258 = vpop.f32.mrb[0].mxu0
    %v259 = vadd.f32 %v66, %v258
    %v260 = vpop.f32.mrb[0].mxu0
    %261 = vmatprep.mubr.f32.mxu0 0.0
    %262 = vmatmul.mubr.f32.gmra.mrb[0].mxu0 %v148
    %v263 = vpop.f32.mrb[0].mxu0
    %v264 = vadd.f32 %v71, %v263
    %v265 = vpop.f32.mrb[0].mxu0
    %266 = vmatprep.mubr.f32.mxu0 0.0
    %267 = vmatmul.mubr.f32.gmra.mrb[0].mxu0 %v151
    %v268 = vpop.f32.mrb[0].mxu0
    %v269 = vadd.f32 %v76, %v268
    %v270 = vpop.f32.mrb[0].mxu0
    %271 = vmatprep.mubr.f32.mxu0 0.0
    %272 = vmatmul.mubr.f32.gmra.mrb[0].mxu0 %v154
    %v273 = vpop.f32.mrb[0].mxu0
    %v274 = vadd.f32 %v81, %v273
    %v275 = vpop.f32.mrb[0].mxu0
    %276 = vmatprep.mubr.f32.mxu0 0.0
    %277 = vmatmul.mubr.f32.gmra.mrb[0].mxu0 %v157
    %v278 = vpop.f32.mrb[0].mxu0
    %v279 = vadd.f32 %v86, %v278
    %v280 = vpop.f32.mrb[0].mxu0
    %281 = vmatprep.mubr.f32.mxu0 0.0
    %282 = vmatmul.mubr.f32.gmra.mrb[0].mxu0 %v160
    %v283 = vpop.f32.mrb[0].mxu0
    %v284 = vadd.f32 %v91, %v283
    %v285 = vpop.f32.mrb[0].mxu0
    %286 = vmatprep.mubr.f32.mxu0 0.0
    %287 = vmatmul.mubr.f32.gmra.mrb[0].mxu0 %v163
    %v288 = vpop.f32.mrb[0].mxu0
    %v289 = vadd.f32 %v96, %v288
    %v290 = vpop.f32.mrb[0].mxu0
    %291 = vmatprep.mubr.f32.mxu0 0.0
    %292 = vmatmul.mubr.f32.gmra.mrb[0].mxu0 %v166
    %v293 = vpop.f32.mrb[0].mxu0
    %v294 = vadd.f32 %v101, %v293
    %v295 = vpop.f32.mrb[0].mxu0
    %296 = vmatprep.mubr.f32.mxu0 0.0
    %297 = vmatmul.mubr.f32.gmra.mrb[0].mxu0 %v169
    %v298 = vpop.f32.mrb[0].mxu0
    %v299 = vadd.f32 %v106, %v298
    %v300 = vpop.f32.mrb[0].mxu0
    %301 = vmatprep.mubr.f32.mxu0 0.0
    %302 = vmatmul.mubr.f32.gmra.mrb[0].mxu0 %v172
    %v303 = vpop.f32.mrb[0].mxu0
    %v304 = vadd.f32 %v111, %v303
    %v305 = vpop.f32.mrb[0].mxu0
    %306 = vmatprep.mubr.f32.mxu0 0.0
    %307 = vmatmul.mubr.f32.gmra.mrb[0].mxu0 %v175
    %v308 = vpop.f32.mrb[0].mxu0
    %v309 = vadd.f32 %v116, %v308
    %v310 = vpop.f32.mrb[0].mxu0
    %311 = vmatprep.mubr.f32.mxu0 0.0
    %312 = vmatmul.mubr.f32.gmra.mrb[0].mxu0 %v178
    %v313 = vpop.f32.mrb[0].mxu0
    %v314 = vadd.f32 %v121, %v313
    %v315 = vpop.f32.mrb[0].mxu0
    %316 = vmatprep.mubr.f32.mxu0 0.0
    %317 = vmatmul.mubr.f32.gmra.mrb[0].mxu0 %v181
    %v318 = vpop.f32.mrb[0].mxu0
    %v319 = vadd.f32 %v126, %v318
    %v320 = vpop.f32.mrb[0].mxu0
    %321 = vmatprep.mubr.f32.mxu0 0.0
    %322 = vmatmul.mubr.f32.gmra.mrb[0].mxu0 %v184
    %v323 = vpop.f32.mrb[0].mxu0
    %v324 = vadd.f32 %v131, %v323
    %v325 = vpop.f32.mrb[0].mxu0
    %326 = vmatprep.mubr.f32.mxu0 0.0
    %327 = vmatmul.mubr.f32.gmra.mrb[0].mxu0 %v187
    %v328 = vpop.f32.mrb[0].mxu0
    %v329 = vadd.f32 %v136, %v328
    %v330 = vpop.f32.mrb[0].mxu0
    %331 = vmatprep.mubr.f32.mxu0 0.0
    %332 = vmatmul.mubr.f32.gmra.mrb[0].mxu0 %v190
    %v333 = vpop.f32.mrb[0].mxu0
    %v334 = vadd.f32 %v141, %v333
    %v335 = vpop.f32.mrb[0].mxu0
    %336 = vdwg.mxu0
    %v337 = vmax.f32 %v259, 0.0
    %v338 = vmax.f32 %v264, 0.0
    %v339 = vmax.f32 %v269, 0.0
    %v340 = vmax.f32 %v274, 0.0
    %v341 = vmax.f32 %v279, 0.0
    %v342 = vmax.f32 %v284, 0.0
    %v343 = vmax.f32 %v289, 0.0
    %v344 = vmax.f32 %v294, 0.0
    %v345 = vmax.f32 %v299, 0.0
    %v346 = vmax.f32 %v304, 0.0
    %v347 = vmax.f32 %v309, 0.0
    %v348 = vmax.f32 %v314, 0.0
    %v349 = vmax.f32 %v319, 0.0
    %v350 = vmax.f32 %v324, 0.0
    %v351 = vmax.f32 %v329, 0.0
    %v352 = vmax.f32 %v334, 0.0
    %v353 = vld [vmem:[%s3] sm:$0xf]
    %v354 = vld [vmem:[%s3 + $0x4] sm:$0xf]
    %v355 = vld [vmem:[%s3 + $0x8] sm:$0xf]
    %v356 = vld [vmem:[%s3 + $0xc] sm:$0xf]
    %v357 = vld [vmem:[%s3 + $0x10] sm:$0xf]
    %v358 = vld [vmem:[%s3 + $0x14] sm:$0xf]
    %v359 = vld [vmem:[%s3 + $0x18] sm:$0xf]
    %v360 = vld [vmem:[%s3 + $0x1c] sm:$0xf]
    %v361 = vld [vmem:[%s3 + $0x20] sm:$0xf]
    %v362 = vld [vmem:[%s3 + $0x24] sm:$0xf]
    %v363 = vld [vmem:[%s3 + $0x28] sm:$0xf]
    %v364 = vld [vmem:[%s3 + $0x2c] sm:$0xf]
    %v365 = vld [vmem:[%s3 + $0x30] sm:$0xf]
    %v366 = vld [vmem:[%s3 + $0x34] sm:$0xf]
    %v367 = vld [vmem:[%s3 + $0x38] sm:$0xf]
    %v368 = vld [vmem:[%s3 + $0x3c] sm:$0xf]
    %v369 = vld [vmem:[%s3 + $0x40] sm:$0xf]
    %v370 = vld [vmem:[%s3 + $0x44] sm:$0xf]
    %v371 = vld [vmem:[%s3 + $0x48] sm:$0xf]
    %v372 = vld [vmem:[%s3 + $0x4c] sm:$0xf]
    %v373 = vld [vmem:[%s3 + $0x50] sm:$0xf]
    %v374 = vld [vmem:[%s3 + $0x54] sm:$0xf]
    %v375 = vld [vmem:[%s3 + $0x58] sm:$0xf]
    %v376 = vld [vmem:[%s3 + $0x5c] sm:$0xf]
    %v377 = vld [vmem:[%s3 + $0x60] sm:$0xf]
    %v378 = vld [vmem:[%s3 + $0x64] sm:$0xf]
    %v379 = vld [vmem:[%s3 + $0x68] sm:$0xf]
    %v380 = vld [vmem:[%s3 + $0x6c] sm:$0xf]
    %v381 = vld [vmem:[%s3 + $0x70] sm:$0xf]
    %v382 = vld [vmem:[%s3 + $0x74] sm:$0xf]
    %v383 = vld [vmem:[%s3 + $0x78] sm:$0xf]
    %v384 = vld [vmem:[%s3 + $0x7c] sm:$0xf]
    %v385 = vpack.c.bf16 %v338, %v337
    %v386 = vpack.c.bf16 %v340, %v339
    %v387 = vpack.c.bf16 %v342, %v341
    %v388 = vpack.c.bf16 %v344, %v343
    %v389 = vpack.c.bf16 %v346, %v345
    %v390 = vpack.c.bf16 %v348, %v347
    %v391 = vpack.c.bf16 %v350, %v349
    %v392 = vpack.c.bf16 %v352, %v351
    %v393 = vld [vmem:[%s4] sm:$0xff]
    %v394 = vld [vmem:[%s4 + $0x8] sm:$0xff]
    %v395 = vld [vmem:[%s4 + $0x10] sm:$0xff]
    %v396 = vld [vmem:[%s4 + $0x18] sm:$0xff]
    %v397 = vld [vmem:[%s4 + $0x20] sm:$0xff]
    %v398 = vld [vmem:[%s4 + $0x28] sm:$0xff]
    %v399 = vld [vmem:[%s4 + $0x30] sm:$0xff]
    %v400 = vld [vmem:[%s4 + $0x38] sm:$0xff]
    %v401 = vld [vmem:[%s4 + $0x40] sm:$0xff]
    %v402 = vld [vmem:[%s4 + $0x48] sm:$0xff]
    %v403 = vld [vmem:[%s4 + $0x50] sm:$0xff]
    %v404 = vld [vmem:[%s4 + $0x58] sm:$0xff]
    %v405 = vld [vmem:[%s4 + $0x60] sm:$0xff]
    %v406 = vld [vmem:[%s4 + $0x68] sm:$0xff]
    %v407 = vld [vmem:[%s4 + $0x70] sm:$0xff]
    %v408 = vld [vmem:[%s4 + $0x78] sm:$0xff]
    %v409 = vld [vmem:[%s4 + $0x80] sm:$0xff]
    %v410 = vld [vmem:[%s4 + $0x88] sm:$0xff]
    %v411 = vld [vmem:[%s4 + $0x90] sm:$0xff]
    %v412 = vld [vmem:[%s4 + $0x98] sm:$0xff]
    %v413 = vld [vmem:[%s4 + $0xa0] sm:$0xff]
    %v414 = vld [vmem:[%s4 + $0xa8] sm:$0xff]
    %v415 = vld [vmem:[%s4 + $0xb0] sm:$0xff]
    %v416 = vld [vmem:[%s4 + $0xb8] sm:$0xff]
    %v417 = vld [vmem:[%s4 + $0xc0] sm:$0xff]
    %v418 = vld [vmem:[%s4 + $0xc8] sm:$0xff]
    %v419 = vld [vmem:[%s4 + $0xd0] sm:$0xff]
    %v420 = vld [vmem:[%s4 + $0xd8] sm:$0xff]
    %v421 = vld [vmem:[%s4 + $0xe0] sm:$0xff]
    %v422 = vld [vmem:[%s4 + $0xe8] sm:$0xff]
    %v423 = vld [vmem:[%s4 + $0xf0] sm:$0xff]
    %v424 = vld [vmem:[%s4 + $0xf8] sm:$0xff]
    %426 = vset.pattern.permute.xlu0 0
    %427 = vperm.xlu0 %426, %v393
    %v428 = vpop.permute.xlu0 %427
    %431 = vset.pattern.permute.xlu0 0
    %432 = vperm.xlu0 %431, %v394
    %v433 = vpop.permute.xlu0 %432
    %436 = vset.pattern.permute.xlu0 0
    %437 = vperm.xlu0 %436, %v395
    %v438 = vpop.permute.xlu0 %437
    %441 = vset.pattern.permute.xlu0 0
    %442 = vperm.xlu0 %441, %v396
    %v443 = vpop.permute.xlu0 %442
    %446 = vset.pattern.permute.xlu0 0
    %447 = vperm.xlu0 %446, %v397
    %v448 = vpop.permute.xlu0 %447
    %451 = vset.pattern.permute.xlu0 0
    %452 = vperm.xlu0 %451, %v398
    %v453 = vpop.permute.xlu0 %452
    %456 = vset.pattern.permute.xlu0 0
    %457 = vperm.xlu0 %456, %v399
    %v458 = vpop.permute.xlu0 %457
    %461 = vset.pattern.permute.xlu0 0
    %462 = vperm.xlu0 %461, %v400
    %v463 = vpop.permute.xlu0 %462
    %466 = vset.pattern.permute.xlu0 0
    %467 = vperm.xlu0 %466, %v401
    %v468 = vpop.permute.xlu0 %467
    %471 = vset.pattern.permute.xlu0 0
    %472 = vperm.xlu0 %471, %v402
    %v473 = vpop.permute.xlu0 %472
    %476 = vset.pattern.permute.xlu0 0
    %477 = vperm.xlu0 %476, %v403
    %v478 = vpop.permute.xlu0 %477
    %481 = vset.pattern.permute.xlu0 0
    %482 = vperm.xlu0 %481, %v404
    %v483 = vpop.permute.xlu0 %482
    %486 = vset.pattern.permute.xlu0 0
    %487 = vperm.xlu0 %486, %v405
    %v488 = vpop.permute.xlu0 %487
    %491 = vset.pattern.permute.xlu0 0
    %492 = vperm.xlu0 %491, %v406
    %v493 = vpop.permute.xlu0 %492
    %496 = vset.pattern.permute.xlu0 0
    %497 = vperm.xlu0 %496, %v407
    %v498 = vpop.permute.xlu0 %497
    %501 = vset.pattern.permute.xlu0 0
    %502 = vperm.xlu0 %501, %v408
    %v503 = vpop.permute.xlu0 %502
    %506 = vset.pattern.permute.xlu0 0
    %507 = vperm.xlu0 %506, %v409
    %v508 = vpop.permute.xlu0 %507
    %511 = vset.pattern.permute.xlu0 0
    %512 = vperm.xlu0 %511, %v410
    %v513 = vpop.permute.xlu0 %512
    %516 = vset.pattern.permute.xlu0 0
    %517 = vperm.xlu0 %516, %v411
    %v518 = vpop.permute.xlu0 %517
    %521 = vset.pattern.permute.xlu0 0
    %522 = vperm.xlu0 %521, %v412
    %v523 = vpop.permute.xlu0 %522
    %526 = vset.pattern.permute.xlu0 0
    %527 = vperm.xlu0 %526, %v413
    %v528 = vpop.permute.xlu0 %527
    %531 = vset.pattern.permute.xlu0 0
    %532 = vperm.xlu0 %531, %v414
    %v533 = vpop.permute.xlu0 %532
    %536 = vset.pattern.permute.xlu0 0
    %537 = vperm.xlu0 %536, %v415
    %v538 = vpop.permute.xlu0 %537
    %541 = vset.pattern.permute.xlu0 0
    %542 = vperm.xlu0 %541, %v416
    %v543 = vpop.permute.xlu0 %542
    %546 = vset.pattern.permute.xlu0 0
    %547 = vperm.xlu0 %546, %v417
    %v548 = vpop.permute.xlu0 %547
    %551 = vset.pattern.permute.xlu0 0
    %552 = vperm.xlu0 %551, %v418
    %v553 = vpop.permute.xlu0 %552
    %556 = vset.pattern.permute.xlu0 0
    %557 = vperm.xlu0 %556, %v419
    %v558 = vpop.permute.xlu0 %557
    %561 = vset.pattern.permute.xlu0 0
    %562 = vperm.xlu0 %561, %v420
    %v563 = vpop.permute.xlu0 %562
    %566 = vset.pattern.permute.xlu0 0
    %567 = vperm.xlu0 %566, %v421
    %v568 = vpop.permute.xlu0 %567
    %571 = vset.pattern.permute.xlu0 0
    %572 = vperm.xlu0 %571, %v422
    %v573 = vpop.permute.xlu0 %572
    %576 = vset.pattern.permute.xlu0 0
    %577 = vperm.xlu0 %576, %v423
    %v578 = vpop.permute.xlu0 %577
    %581 = vset.pattern.permute.xlu0 0
    %582 = vperm.xlu0 %581, %v424
    %v583 = vpop.permute.xlu0 %582
    %v617 = vunpack.c.l.b16 %v353
    %v618 = vunpack.c.l.b16 %v354
    %v619 = vunpack.c.l.b16 %v355
    %v620 = vunpack.c.l.b16 %v356
    %v621 = vunpack.c.l.b16 %v357
    %v622 = vunpack.c.l.b16 %v358
    %v623 = vunpack.c.l.b16 %v359
    %v624 = vunpack.c.l.b16 %v360
    %v625 = vunpack.c.l.b16 %v361
    %v626 = vunpack.c.l.b16 %v362
    %v627 = vunpack.c.l.b16 %v363
    %v628 = vunpack.c.l.b16 %v364
    %v629 = vunpack.c.l.b16 %v365
    %v630 = vunpack.c.l.b16 %v366
    %v631 = vunpack.c.l.b16 %v367
    %v632 = vunpack.c.l.b16 %v368
    %v633 = vunpack.c.l.b16 %v369
    %v634 = vunpack.c.l.b16 %v370
    %v635 = vunpack.c.l.b16 %v371
    %v636 = vunpack.c.l.b16 %v372
    %v637 = vunpack.c.l.b16 %v373
    %v638 = vunpack.c.l.b16 %v374
    %v639 = vunpack.c.l.b16 %v375
    %v640 = vunpack.c.l.b16 %v376
    %v641 = vunpack.c.l.b16 %v377
    %v642 = vunpack.c.l.b16 %v378
    %v643 = vunpack.c.l.b16 %v379
    %v644 = vunpack.c.l.b16 %v380
    %v645 = vunpack.c.l.b16 %v381
    %v646 = vunpack.c.l.b16 %v382
    %v647 = vunpack.c.l.b16 %v383
    %v648 = vunpack.c.l.b16 %v384
    %v649 = vpack.c.b16 %v618, %v617
    %v650 = vpack.c.b16 %v620, %v619
    %v651 = vpack.c.b16 %v622, %v621
    %v652 = vpack.c.b16 %v624, %v623
    %v653 = vpack.c.b16 %v626, %v625
    %v654 = vpack.c.b16 %v628, %v627
    %v655 = vpack.c.b16 %v630, %v629
    %v656 = vpack.c.b16 %v632, %v631
    %v657 = vpack.c.b16 %v634, %v633
    %v658 = vpack.c.b16 %v636, %v635
    %v659 = vpack.c.b16 %v638, %v637
    %v660 = vpack.c.b16 %v640, %v639
    %v661 = vpack.c.b16 %v642, %v641
    %v662 = vpack.c.b16 %v644, %v643
    %v663 = vpack.c.b16 %v646, %v645
    %v664 = vpack.c.b16 %v648, %v647
    %681 = vmatprep.subr.bf16.mxu0 0
    %682 = vmatpush1.bf16.msra.mxu0 %v385
    %683 = vmatprep.subr.bf16.mxu0 0
    %684 = vmatpush1.bf16.msra.mxu0 %v386
    %685 = vmatprep.subr.bf16.mxu0 0
    %686 = vmatpush1.bf16.msra.mxu0 %v387
    %687 = vmatprep.subr.bf16.mxu0 0
    %688 = vmatpush1.bf16.msra.mxu0 %v388
    %689 = vmatprep.subr.bf16.mxu0 0
    %690 = vmatpush1.bf16.msra.mxu0 %v389
    %691 = vmatprep.subr.bf16.mxu0 0
    %692 = vmatpush1.bf16.msra.mxu0 %v390
    %693 = vmatprep.subr.bf16.mxu0 0
    %694 = vmatpush1.bf16.msra.mxu0 %v391
    %695 = vmatprep.subr.bf16.mxu0 0
    %696 = vmatpush1.bf16.msra.mxu0 %v392
    %697 = vmatprep.subr.bf16.mxu0 0
    %698 = vmatpush1.bf16.msra.mxu0 0
    %699 = vmatprep.subr.bf16.mxu0 0
    %700 = vmatpush1.bf16.msra.mxu0 0
    %701 = vmatprep.subr.bf16.mxu0 0
    %702 = vmatpush1.bf16.msra.mxu0 0
    %703 = vmatprep.subr.bf16.mxu0 0
    %704 = vmatpush1.bf16.msra.mxu0 0
    %705 = vmatprep.subr.bf16.mxu0 0
    %706 = vmatpush1.bf16.msra.mxu0 0
    %707 = vmatprep.subr.bf16.mxu0 0
    %708 = vmatpush1.bf16.msra.mxu0 0
    %709 = vmatprep.subr.bf16.mxu0 0
    %710 = vmatpush1.bf16.msra.mxu0 0
    %711 = vmatprep.subr.bf16.mxu0 0
    %712 = vmatpush1.bf16.msra.mxu0 0
    %713 = vmatprep.mubr.bf16.mxu0 0
    %714 = vmatmul.mubr.bf16.gmra.mrb[0].mxu0 %v649
    %v715 = vpop.f32.mrb[0].mxu0
    %v716 = vadd.f32 %v428, %v715
    %v717 = vpop.f32.mrb[0].mxu0
    %v718 = vpop.f32.mrb[0].mxu0
    %v719 = vadd.f32 %v433, %v718
    %v720 = vpop.f32.mrb[0].mxu0
    %721 = vmatprep.mubr.bf16.mxu0 0
    %722 = vmatmul.mubr.bf16.gmra.mrb[0].mxu0 %v650
    %v723 = vpop.f32.mrb[0].mxu0
    %v724 = vadd.f32 %v438, %v723
    %v725 = vpop.f32.mrb[0].mxu0
    %v726 = vpop.f32.mrb[0].mxu0
    %v727 = vadd.f32 %v443, %v726
    %v728 = vpop.f32.mrb[0].mxu0
    %729 = vmatprep.mubr.bf16.mxu0 0
    %730 = vmatmul.mubr.bf16.gmra.mrb[0].mxu0 %v651
    %v731 = vpop.f32.mrb[0].mxu0
    %v732 = vadd.f32 %v448, %v731
    %v733 = vpop.f32.mrb[0].mxu0
    %v734 = vpop.f32.mrb[0].mxu0
    %v735 = vadd.f32 %v453, %v734
    %v736 = vpop.f32.mrb[0].mxu0
    %737 = vmatprep.mubr.bf16.mxu0 0
    %738 = vmatmul.mubr.bf16.gmra.mrb[0].mxu0 %v652
    %v739 = vpop.f32.mrb[0].mxu0
    %v740 = vadd.f32 %v458, %v739
    %v741 = vpop.f32.mrb[0].mxu0
    %v742 = vpop.f32.mrb[0].mxu0
    %v743 = vadd.f32 %v463, %v742
    %v744 = vpop.f32.mrb[0].mxu0
    %745 = vmatprep.mubr.bf16.mxu0 0
    %746 = vmatmul.mubr.bf16.gmra.mrb[0].mxu0 %v653
    %v747 = vpop.f32.mrb[0].mxu0
    %v748 = vadd.f32 %v468, %v747
    %v749 = vpop.f32.mrb[0].mxu0
    %v750 = vpop.f32.mrb[0].mxu0
    %v751 = vadd.f32 %v473, %v750
    %v752 = vpop.f32.mrb[0].mxu0
    %753 = vmatprep.mubr.bf16.mxu0 0
    %754 = vmatmul.mubr.bf16.gmra.mrb[0].mxu0 %v654
    %v755 = vpop.f32.mrb[0].mxu0
    %v756 = vadd.f32 %v478, %v755
    %v757 = vpop.f32.mrb[0].mxu0
    %v758 = vpop.f32.mrb[0].mxu0
    %v759 = vadd.f32 %v483, %v758
    %v760 = vpop.f32.mrb[0].mxu0
    %761 = vmatprep.mubr.bf16.mxu0 0
    %762 = vmatmul.mubr.bf16.gmra.mrb[0].mxu0 %v655
    %v763 = vpop.f32.mrb[0].mxu0
    %v764 = vadd.f32 %v488, %v763
    %v765 = vpop.f32.mrb[0].mxu0
    %v766 = vpop.f32.mrb[0].mxu0
    %v767 = vadd.f32 %v493, %v766
    %v768 = vpop.f32.mrb[0].mxu0
    %769 = vmatprep.mubr.bf16.mxu0 0
    %770 = vmatmul.mubr.bf16.gmra.mrb[0].mxu0 %v656
    %v771 = vpop.f32.mrb[0].mxu0
    %v772 = vadd.f32 %v498, %v771
    %v773 = vpop.f32.mrb[0].mxu0
    %v774 = vpop.f32.mrb[0].mxu0
    %v775 = vadd.f32 %v503, %v774
    %v776 = vpop.f32.mrb[0].mxu0
    %777 = vmatprep.mubr.bf16.mxu0 0
    %778 = vmatmul.mubr.bf16.gmra.mrb[0].mxu0 %v657
    %v779 = vpop.f32.mrb[0].mxu0
    %v780 = vadd.f32 %v508, %v779
    %v781 = vpop.f32.mrb[0].mxu0
    %v782 = vpop.f32.mrb[0].mxu0
    %v783 = vadd.f32 %v513, %v782
    %v784 = vpop.f32.mrb[0].mxu0
    %785 = vmatprep.mubr.bf16.mxu0 0
    %786 = vmatmul.mubr.bf16.gmra.mrb[0].mxu0 %v658
    %v787 = vpop.f32.mrb[0].mxu0
    %v788 = vadd.f32 %v518, %v787
    %v789 = vpop.f32.mrb[0].mxu0
    %v790 = vpop.f32.mrb[0].mxu0
    %v791 = vadd.f32 %v523, %v790
    %v792 = vpop.f32.mrb[0].mxu0
    %793 = vmatprep.mubr.bf16.mxu0 0
    %794 = vmatmul.mubr.bf16.gmra.mrb[0].mxu0 %v659
    %v795 = vpop.f32.mrb[0].mxu0
    %v796 = vadd.f32 %v528, %v795
    %v797 = vpop.f32.mrb[0].mxu0
    %v798 = vpop.f32.mrb[0].mxu0
    %v799 = vadd.f32 %v533, %v798
    %v800 = vpop.f32.mrb[0].mxu0
    %801 = vmatprep.mubr.bf16.mxu0 0
    %802 = vmatmul.mubr.bf16.gmra.mrb[0].mxu0 %v660
    %v803 = vpop.f32.mrb[0].mxu0
    %v804 = vadd.f32 %v538, %v803
    %v805 = vpop.f32.mrb[0].mxu0
    %v806 = vpop.f32.mrb[0].mxu0
    %v807 = vadd.f32 %v543, %v806
    %v808 = vpop.f32.mrb[0].mxu0
    %809 = vmatprep.mubr.bf16.mxu0 0
    %810 = vmatmul.mubr.bf16.gmra.mrb[0].mxu0 %v661
    %v811 = vpop.f32.mrb[0].mxu0
    %v812 = vadd.f32 %v548, %v811
    %v813 = vpop.f32.mrb[0].mxu0
    %v814 = vpop.f32.mrb[0].mxu0
    %v815 = vadd.f32 %v553, %v814
    %v816 = vpop.f32.mrb[0].mxu0
    %817 = vmatprep.mubr.bf16.mxu0 0
    %818 = vmatmul.mubr.bf16.gmra.mrb[0].mxu0 %v662
    %v819 = vpop.f32.mrb[0].mxu0
    %v820 = vadd.f32 %v558, %v819
    %v821 = vpop.f32.mrb[0].mxu0
    %v822 = vpop.f32.mrb[0].mxu0
    %v823 = vadd.f32 %v563, %v822
    %v824 = vpop.f32.mrb[0].mxu0
    %825 = vmatprep.mubr.bf16.mxu0 0
    %826 = vmatmul.mubr.bf16.gmra.mrb[0].mxu0 %v663
    %v827 = vpop.f32.mrb[0].mxu0
    %v828 = vadd.f32 %v568, %v827
    %v829 = vpop.f32.mrb[0].mxu0
    %v830 = vpop.f32.mrb[0].mxu0
    %v831 = vadd.f32 %v573, %v830
    %v832 = vpop.f32.mrb[0].mxu0
    %833 = vmatprep.mubr.bf16.mxu0 0
    %834 = vmatmul.mubr.bf16.gmra.mrb[0].mxu0 %v664
    %v835 = vpop.f32.mrb[0].mxu0
    %v836 = vadd.f32 %v578, %v835
    %v837 = vpop.f32.mrb[0].mxu0
    %v838 = vpop.f32.mrb[0].mxu0
    %v839 = vadd.f32 %v583, %v838
    %v840 = vpop.f32.mrb[0].mxu0
    %841 = vdwg.mxu0
    %v842 = vmax.f32 %v716, 0.0
    %v843 = vmax.f32 %v719, 0.0
    %v844 = vmax.f32 %v724, 0.0
    %v845 = vmax.f32 %v727, 0.0
    %v846 = vmax.f32 %v732, 0.0
    %v847 = vmax.f32 %v735, 0.0
    %v848 = vmax.f32 %v740, 0.0
    %v849 = vmax.f32 %v743, 0.0
    %v850 = vmax.f32 %v748, 0.0
    %v851 = vmax.f32 %v751, 0.0
    %v852 = vmax.f32 %v756, 0.0
    %v853 = vmax.f32 %v759, 0.0
    %v854 = vmax.f32 %v764, 0.0
    %v855 = vmax.f32 %v767, 0.0
    %v856 = vmax.f32 %v772, 0.0
    %v857 = vmax.f32 %v775, 0.0
    %v858 = vmax.f32 %v780, 0.0
    %v859 = vmax.f32 %v783, 0.0
    %v860 = vmax.f32 %v788, 0.0
    %v861 = vmax.f32 %v791, 0.0
    %v862 = vmax.f32 %v796, 0.0
    %v863 = vmax.f32 %v799, 0.0
    %v864 = vmax.f32 %v804, 0.0
    %v865 = vmax.f32 %v807, 0.0
    %v866 = vmax.f32 %v812, 0.0
    %v867 = vmax.f32 %v815, 0.0
    %v868 = vmax.f32 %v820, 0.0
    %v869 = vmax.f32 %v823, 0.0
    %v870 = vmax.f32 %v828, 0.0
    %v871 = vmax.f32 %v831, 0.0
    %v872 = vmax.f32 %v836, 0.0
    %v873 = vmax.f32 %v839, 0.0
    %v874 = vld [vmem:[%s5] sm:$0x3]
    %v875 = vld [vmem:[#allocation2] sm:$0x1]
    %877 = vset.pattern.permute.xlu0 0
    %878 = vperm.xlu0 %877, %v875
    %v879 = vpop.permute.xlu0 %878
    %v881 = vlaneseq
    %v882 = vshrl.u32 %v881, 7
    %v883 = vsub.s32 0, %v882
    %v884 = vrot.slane %v879, %v883
    %v886 = vlaneseq
    %v887 = vshrl.u32 %v886, 7
    %v888 = vsub.s32 0, %v887
    %v889 = vrot.slane %v874, %v888
    %v890 = vlaneseq
    %v891 = vshrl.u32 %v890, 7
    %v892 = vsub.s32 1, %v891
    %v893 = vrot.slane %v874, %v892
    %896 = vmatprep.subr.mxu0 0.0
    %897 = vmatpush1.msra.mxu0 %v842
    %898 = vmatprep.subr.mxu0 0.0
    %899 = vmatpush1.msra.mxu0 %v843
    %900 = vmatprep.subr.mxu0 0.0
    %901 = vmatpush1.msra.mxu0 %v844
    %902 = vmatprep.subr.mxu0 0.0
    %903 = vmatpush1.msra.mxu0 %v845
    %904 = vmatprep.subr.mxu0 0.0
    %905 = vmatpush1.msra.mxu0 %v846
    %906 = vmatprep.subr.mxu0 0.0
    %907 = vmatpush1.msra.mxu0 %v847
    %908 = vmatprep.subr.mxu0 0.0
    %909 = vmatpush1.msra.mxu0 %v848
    %910 = vmatprep.subr.mxu0 0.0
    %911 = vmatpush1.msra.mxu0 %v849
    %912 = vmatprep.subr.mxu0 0.0
    %913 = vmatpush1.msra.mxu0 %v850
    %914 = vmatprep.subr.mxu0 0.0
    %915 = vmatpush1.msra.mxu0 %v851
    %916 = vmatprep.subr.mxu0 0.0
    %917 = vmatpush1.msra.mxu0 %v852
    %918 = vmatprep.subr.mxu0 0.0
    %919 = vmatpush1.msra.mxu0 %v853
    %920 = vmatprep.subr.mxu0 0.0
    %921 = vmatpush1.msra.mxu0 %v854
    %922 = vmatprep.subr.mxu0 0.0
    %923 = vmatpush1.msra.mxu0 %v855
    %924 = vmatprep.subr.mxu0 0.0
    %925 = vmatpush1.msra.mxu0 %v856
    %926 = vmatprep.subr.mxu0 0.0
    %927 = vmatpush1.msra.mxu0 %v857
    %928 = vmatprep.subr.mxu0 0.0
    %929 = vmatpush1.msra.mxu0 %v858
    %930 = vmatprep.subr.mxu0 0.0
    %931 = vmatpush1.msra.mxu0 %v859
    %932 = vmatprep.subr.mxu0 0.0
    %933 = vmatpush1.msra.mxu0 %v860
    %934 = vmatprep.subr.mxu0 0.0
    %935 = vmatpush1.msra.mxu0 %v861
    %936 = vmatprep.subr.mxu0 0.0
    %937 = vmatpush1.msra.mxu0 %v862
    %938 = vmatprep.subr.mxu0 0.0
    %939 = vmatpush1.msra.mxu0 %v863
    %940 = vmatprep.subr.mxu0 0.0
    %941 = vmatpush1.msra.mxu0 %v864
    %942 = vmatprep.subr.mxu0 0.0
    %943 = vmatpush1.msra.mxu0 %v865
    %944 = vmatprep.subr.mxu0 0.0
    %945 = vmatpush1.msra.mxu0 %v866
    %946 = vmatprep.subr.mxu0 0.0
    %947 = vmatpush1.msra.mxu0 %v867
    %948 = vmatprep.subr.mxu0 0.0
    %949 = vmatpush1.msra.mxu0 %v868
    %950 = vmatprep.subr.mxu0 0.0
    %951 = vmatpush1.msra.mxu0 %v869
    %952 = vmatprep.subr.mxu0 0.0
    %953 = vmatpush1.msra.mxu0 %v870
    %954 = vmatprep.subr.mxu0 0.0
    %955 = vmatpush1.msra.mxu0 %v871
    %956 = vmatprep.subr.mxu0 0.0
    %957 = vmatpush1.msra.mxu0 %v872
    %958 = vmatprep.subr.mxu0 0.0
    %959 = vmatpush1.msra.mxu0 %v873
    %960 = vmatprep.mubr.f32.mxu0 %v893
    %961 = vmatmul.mubr.f32.gmra.mrb[0].mxu0 %v889
    %v962 = vpop.f32.mrb[0].mxu0
    %v963 = vadd.f32 %v884, %v962
    %v964 = vpop.f32.mrb[0].mxu0
    %965 = vdwg.mxu0
    %vm966 = vcmask 57344
    %967 = vst.msk [vmem:[#allocation3] sm:$0x1] %vm966, %v963
    // Predicated region
    $region30: #{tpu_custom_call.1} parent=1 // pred_check
      _
    $region31: #{tpu_custom_call.1} parent=1 // pred_check_branch
      %969 = sbr.rel (0) target = $region33
    $region32: #{tpu_custom_call.1} parent=1 // pred_region
      %s971 = ssub.s32 16, 16
      %972 = vsyncadd [#allocation4], %s971
      %s974 = sshll.u32 [#allocation3], 4
      %s975 = int_to_ptr.vmem [resolvable:$true] %s974
      %977 = dma.vmem_to_hbm [thread:$0]  %s975, 16, %s7, [#allocation4]
    $region33: #{tpu_custom_call.1} parent=1 // pred_fallthru
      _
    // Predicated region
    $region34: #{tpu_custom_call.1} parent=1 // pred_check
      _
    $region35: #{tpu_custom_call.1} parent=1 // pred_check_branch
      %979 = sbr.rel (0) target = $region37
    $region36: #{tpu_custom_call.1} parent=1 // pred_region
      %980 = dma.done [#allocation4], 16
    $region37: #{tpu_custom_call.1} parent=1 // pred_fallthru
      _
    %981 = vsyncpa [#allocation4], 1

</llo_original>
